<compile_context>
chip_gen: v5e
topology: v5e:2x2
jax: 0.10.0
libtpu: 0.0.40
codegen_flags: <defaults>
</compile_context>

<pallas_src>
import jax
import jax.numpy as jnp
from jax.experimental import pallas as pl
from jax.experimental.pallas import tpu as pltpu

N_ATOM_FEATURES = 16   # module constant (chosen for this synthetic script)
HIDDEN_DIM = 128       # nn.Linear hidden_dim default


def _value_kernel(x_ref, adj_ref, w1_ref, b1_ref, w2_ref, b2_ref, w3_ref,
                  b3_ref, out_ref):
    """One grid step = TB graphs.

    x_ref   : [TB, N, F]  VMEM
    adj_ref : [TB, N, N]  VMEM
    w1_ref  : [F, H],  b1_ref : [1, H]
    w2_ref  : [H, H],  b2_ref : [1, H]
    w3_ref  : [1, H]   (final-layer weight stored as a row)
    b3_ref  : [1]      SMEM scalar
    out_ref : [1, 1, TB]  lane-dense per-graph values
    """
    TB, N, F = x_ref.shape
    H = w1_ref.shape[1]

    # ---- Linear(F -> H) on the flattened [TB*N, F] slab (MXU, M = TB*N) ----
    x_flat = x_ref[...].reshape(TB * N, F)
    h_flat = jnp.dot(x_flat, w1_ref[...],
                     preferred_element_type=jnp.float32) + b1_ref[...]

    # ---- per-graph aggregation: o[b] = adj[b] @ h[b] ----
    h3 = h_flat.reshape(TB, N, H)
    o3 = jnp.einsum('bij,bjd->bid', adj_ref[...], h3,
                    preferred_element_type=jnp.float32)

    # ---- Linear(H -> H) + ReLU on the flattened slab (dominant matmul) ----
    o_flat = o3.reshape(TB * N, H)
    z_flat = jnp.maximum(
        jnp.dot(o_flat, w2_ref[...],
                preferred_element_type=jnp.float32) + b2_ref[...],
        0.0)

    # ---- final Linear(H -> 1) + sum over atoms, done algebraically ----
    #   sum_i (z[b,i] @ w3 + b3) == (sum_i z[b,i]) . w3 + N * b3
    zsum = z_flat.reshape(TB, N, H).sum(axis=1)      # [TB, H]  sublane reduce
    v = jnp.sum(zsum * w3_ref[...], axis=1)          # [TB]     VPU mul + lane reduce
    out_ref[...] = (v + b3_ref[0] * N).reshape(1, 1, TB)


def value_network_forward(x, adj, params, *, graphs_per_block=16):
    """x: [B, N, F] f32, adj: [B, N, N] f32 -> [B] f32."""
    B, N, F = x.shape
    H = params["w1"].shape[1]

    TB = max(1, min(graphs_per_block, B))
    G = pl.cdiv(B, TB)
    Bp = G * TB
    if Bp != B:
        # pad the batch; padded graphs produce values that are discarded below
        pad = Bp - B
        x = jnp.pad(x, ((0, pad), (0, 0), (0, 0)))
        adj = jnp.pad(adj, ((0, pad), (0, 0), (0, 0)))

    w1 = params["w1"]                       # [F, H]
    b1 = params["b1"].reshape(1, H)
    w2 = params["w2"]                       # [H, H]
    b2 = params["b2"].reshape(1, H)
    w3 = params["w3"].reshape(1, H)         # [H, 1] -> row form
    b3 = params["b3"].reshape(1)            # SMEM scalar

    out = pl.pallas_call(
        _value_kernel,
        out_shape=jax.ShapeDtypeStruct((G, 1, TB), jnp.float32),
        grid_spec=pltpu.PrefetchScalarGridSpec(
            num_scalar_prefetch=0,
            grid=(G,),
            in_specs=[
                pl.BlockSpec((TB, N, F), lambda g: (g, 0, 0)),       # x  (TB graphs)
                pl.BlockSpec((TB, N, N), lambda g: (g, 0, 0)),       # adj
                pl.BlockSpec((F, H), lambda g: (0, 0)),              # W1 (resident)
                pl.BlockSpec((1, H), lambda g: (0, 0)),              # b1
                pl.BlockSpec((H, H), lambda g: (0, 0)),              # W2
                pl.BlockSpec((1, H), lambda g: (0, 0)),              # b2
                pl.BlockSpec((1, H), lambda g: (0, 0)),              # W3 row
                pl.BlockSpec(memory_space=pltpu.MemorySpace.SMEM),   # b3 scalar
            ],
            out_specs=pl.BlockSpec((1, 1, TB), lambda g: (g, 0, 0)),
        ),
        compiler_params=pltpu.CompilerParams(
            dimension_semantics=("parallel",)),
    )(x, adj, w1, b1, w2, b2, w3, b3)
    return out.reshape(Bp)[:B]


def init_params(key, n_features=N_ATOM_FEATURES, hidden_dim=HIDDEN_DIM):
    """Deterministic synthetic parameters (stored as [in, out])."""
    k1, k2, k3, k4, k5, k6 = jax.random.split(key, 6)
    s = 0.1
    return {
        "w1": s * jax.random.normal(k1, (n_features, hidden_dim), jnp.float32),
        "b1": s * jax.random.normal(k2, (hidden_dim,), jnp.float32),
        "w2": s * jax.random.normal(k3, (hidden_dim, hidden_dim), jnp.float32),
        "b2": s * jax.random.normal(k4, (hidden_dim,), jnp.float32),
        "w3": s * jax.random.normal(k5, (hidden_dim, 1), jnp.float32),
        "b3": s * jax.random.normal(k6, (1,), jnp.float32),
    }


def value_network_reference(x, adj, params):
    """Plain-JAX reference matching the PyTorch forward."""
    h = x @ params["w1"] + params["b1"]                      # [B, N, H]
    o = adj @ h                                              # [B, N, H]
    z = jnp.maximum(o @ params["w2"] + params["b2"], 0.0)    # [B, N, H]
    v = (z @ params["w3"] + params["b3"])[..., 0]            # [B, N]
    return v.sum(-1)                                         # [B]


if __name__ == "__main__":
    key = jax.random.PRNGKey(0)
    kp, kx, ka = jax.random.split(key, 3)

    B, N = 16, 8  # 16 graphs of 8 atoms -> one grid step with a 128-row slab
    params = init_params(kp)

    x = jax.random.normal(kx, (B, N, N_ATOM_FEATURES), jnp.float32)
    # symmetric 0/1 adjacency with self loops
    a = jax.random.uniform(ka, (B, N, N))
    adj = ((a + jnp.swapaxes(a, -1, -2)) > 1.0).astype(jnp.float32)
    adj = jnp.maximum(adj, jnp.eye(N, dtype=jnp.float32)[None])

    out = value_network_forward(x, adj, params, graphs_per_block=16)
    out = jax.block_until_ready(out)
    ref = value_network_reference(x, adj, params)
    assert out.shape == (B,)
    assert jnp.allclose(out, ref, atol=1e-4, rtol=1e-4), (out, ref)

    # second config: batch not a multiple of the block (exercises padding, G > 1)
    out2 = value_network_forward(x[:6], adj[:6], params, graphs_per_block=4)
    out2 = jax.block_until_ready(out2)
    ref2 = value_network_reference(x[:6], adj[:6], params)
    assert out2.shape == (6,)
    assert jnp.allclose(out2, ref2, atol=1e-4, rtol=1e-4), (out2, ref2)

    print("KERNEL_OK")
</pallas_src>

<mosaic_0001>
module attributes {stable_mosaic.version = 11 : i64} {
  func.func @_value_kernel(%arg0: i32, %arg1: memref<16x8x16xf32, #tpu.memory_space<vmem>>, %arg2: memref<16x8x8xf32, #tpu.memory_space<vmem>>, %arg3: memref<16x128xf32, #tpu.memory_space<vmem>>, %arg4: memref<1x128xf32, #tpu.memory_space<vmem>>, %arg5: memref<128x128xf32, #tpu.memory_space<vmem>>, %arg6: memref<1x128xf32, #tpu.memory_space<vmem>>, %arg7: memref<1x128xf32, #tpu.memory_space<vmem>>, %arg8: memref<1xf32, #tpu.memory_space<smem>>, %arg9: memref<1x1x16xf32, #tpu.memory_space<vmem>>) attributes {dimension_semantics = [#tpu.dimension_semantics<parallel>], iteration_bounds = array<i64: 1>, scalar_prefetch = 0 : i64, scratch_operands = 0 : i64, tpu.core_type = #tpu.core_type<tc>, window_params = [{transform_indices = @transform_0, window_bounds = array<i64: 16, 8, 16>}, {transform_indices = @transform_1, window_bounds = array<i64: 16, 8, 8>}, {pipeline_mode = #tpu.pipeline_mode<synchronous>, transform_indices = @transform_2, window_bounds = array<i64: 16, 128>}, {pipeline_mode = #tpu.pipeline_mode<synchronous>, transform_indices = @transform_3, window_bounds = array<i64: 1, 128>}, {pipeline_mode = #tpu.pipeline_mode<synchronous>, transform_indices = @transform_4, window_bounds = array<i64: 128, 128>}, {pipeline_mode = #tpu.pipeline_mode<synchronous>, transform_indices = @transform_5, window_bounds = array<i64: 1, 128>}, {pipeline_mode = #tpu.pipeline_mode<synchronous>, transform_indices = @transform_6, window_bounds = array<i64: 1, 128>}, {transform_indices = @transform_7, window_bounds = array<i64: 1>}, {transform_indices = @transform_8, window_bounds = array<i64: 1, 1, 16>}]} {
    %c0 = arith.constant 0 : index
    %c0_0 = arith.constant 0 : index
    %c0_1 = arith.constant 0 : index
    %0 = vector.load %arg1[%c0, %c0_0, %c0_1] : memref<16x8x16xf32, #tpu.memory_space<vmem>>, vector<16x8x16xf32>
    %1 = vector.shape_cast %0 : vector<16x8x16xf32> to vector<128x16xf32>
    %c0_2 = arith.constant 0 : index
    %c0_3 = arith.constant 0 : index
    %2 = vector.load %arg3[%c0_2, %c0_3] : memref<16x128xf32, #tpu.memory_space<vmem>>, vector<16x128xf32>
    %cst = arith.constant dense<0.000000e+00> : vector<128x128xf32>
    %3 = tpu.matmul %1, %2, %cst {dimension_numbers = #tpu.dot_dimension_numbers<[1], [0], [0], [1], [0, 0, 1, 1], [], []>} : vector<128x16xf32>, vector<16x128xf32>, vector<128x128xf32> -> vector<128x128xf32>
    %c0_4 = arith.constant 0 : index
    %c0_5 = arith.constant 0 : index
    %4 = vector.load %arg4[%c0_4, %c0_5] : memref<1x128xf32, #tpu.memory_space<vmem>>, vector<1x128xf32>
    %5 = vector.broadcast %4 : vector<1x128xf32> to vector<128x128xf32>
    %6 = arith.addf %3, %5 : vector<128x128xf32>
    %7 = vector.shape_cast %6 : vector<128x128xf32> to vector<16x8x128xf32>
    %c0_6 = arith.constant 0 : index
    %c0_7 = arith.constant 0 : index
    %c0_8 = arith.constant 0 : index
    %8 = vector.load %arg2[%c0_6, %c0_7, %c0_8] : memref<16x8x8xf32, #tpu.memory_space<vmem>>, vector<16x8x8xf32>
    "tpu.trace_start"() <{level = 10 : i32, message = "bij,bjd->bid"}> : () -> ()
    %cst_9 = arith.constant dense<0.000000e+00> : vector<16x8x128xf32>
    %9 = tpu.matmul %8, %7, %cst_9 {dimension_numbers = #tpu.dot_dimension_numbers<[2], [1], [1], [2], [0, 0, 0, 1, 1, 2], [0], [0]>} : vector<16x8x8xf32>, vector<16x8x128xf32>, vector<16x8x128xf32> -> vector<16x8x128xf32>
    "tpu.trace_stop"() : () -> ()
    %10 = vector.shape_cast %9 : vector<16x8x128xf32> to vector<128x128xf32>
    %c0_10 = arith.constant 0 : index
    %c0_11 = arith.constant 0 : index
    %11 = vector.load %arg5[%c0_10, %c0_11] : memref<128x128xf32, #tpu.memory_space<vmem>>, vector<128x128xf32>
    %cst_12 = arith.constant dense<0.000000e+00> : vector<128x128xf32>
    %12 = tpu.matmul %10, %11, %cst_12 {dimension_numbers = #tpu.dot_dimension_numbers<[1], [0], [0], [1], [0, 0, 1, 1], [], []>} : vector<128x128xf32>, vector<128x128xf32>, vector<128x128xf32> -> vector<128x128xf32>
    %c0_13 = arith.constant 0 : index
    %c0_14 = arith.constant 0 : index
    %13 = vector.load %arg6[%c0_13, %c0_14] : memref<1x128xf32, #tpu.memory_space<vmem>>, vector<1x128xf32>
    %14 = vector.broadcast %13 : vector<1x128xf32> to vector<128x128xf32>
    %15 = arith.addf %12, %14 : vector<128x128xf32>
    %cst_15 = arith.constant 0.000000e+00 : f32
    %16 = vector.broadcast %cst_15 : f32 to vector<128x128xf32>
    %17 = arith.maximumf %15, %16 : vector<128x128xf32>
    %18 = vector.shape_cast %17 : vector<128x128xf32> to vector<16x8x128xf32>
    %cst_16 = arith.constant dense<0.000000e+00> : vector<16x128xf32>
    %19 = vector.multi_reduction <add>, %18, %cst_16 [1] : vector<16x8x128xf32> to vector<16x128xf32>
    %c0_17 = arith.constant 0 : index
    %c0_18 = arith.constant 0 : index
    %20 = vector.load %arg7[%c0_17, %c0_18] : memref<1x128xf32, #tpu.memory_space<vmem>>, vector<1x128xf32>
    %21 = vector.broadcast %20 : vector<1x128xf32> to vector<16x128xf32>
    %22 = arith.mulf %19, %21 : vector<16x128xf32>
    %cst_19 = arith.constant dense<0.000000e+00> : vector<16xf32>
    %23 = vector.multi_reduction <add>, %22, %cst_19 [1] : vector<16x128xf32> to vector<16xf32>
    %c0_20 = arith.constant 0 : index
    %24 = memref.load %arg8[%c0_20] : memref<1xf32, #tpu.memory_space<smem>>
    %cst_21 = arith.constant 8.000000e+00 : f32
    %25 = arith.mulf %24, %cst_21 : f32
    %26 = vector.broadcast %25 : f32 to vector<16xf32>
    %27 = arith.addf %23, %26 : vector<16xf32>
    %28 = vector.shape_cast %27 : vector<16xf32> to vector<1x1x16xf32>
    %c0_22 = arith.constant 0 : index
    %c0_23 = arith.constant 0 : index
    %c0_24 = arith.constant 0 : index
    %29 = vector.load %arg9[%c0_22, %c0_23, %c0_24] : memref<1x1x16xf32, #tpu.memory_space<vmem>>, vector<1x1x16xf32>
    tpu.vector_store %arg9[%c0_22, %c0_23, %c0_24], %28 {strides = array<i32>} : memref<1x1x16xf32, #tpu.memory_space<vmem>>, vector<1x1x16xf32>,
    return
  }
  func.func @transform_0(%arg0: i32) -> (i32, i32, i32) {
    %c0_i32 = arith.constant 0 : i32
    %c0_i32_0 = arith.constant 0 : i32
    %c0_i32_1 = arith.constant 0 : i32
    return %arg0, %c0_i32, %c0_i32_0 : i32, i32, i32
  }
  func.func @transform_1(%arg0: i32) -> (i32, i32, i32) {
    %c0_i32 = arith.constant 0 : i32
    %c0_i32_0 = arith.constant 0 : i32
    %c0_i32_1 = arith.constant 0 : i32
    return %arg0, %c0_i32, %c0_i32_0 : i32, i32, i32
  }
  func.func @transform_2(%arg0: i32) -> (i32, i32) {
    %c0_i32 = arith.constant 0 : i32
    %c0_i32_0 = arith.constant 0 : i32
    %c0_i32_1 = arith.constant 0 : i32
    return %c0_i32, %c0_i32_0 : i32, i32
  }
  func.func @transform_3(%arg0: i32) -> (i32, i32) {
    %c0_i32 = arith.constant 0 : i32
    %c0_i32_0 = arith.constant 0 : i32
    %c0_i32_1 = arith.constant 0 : i32
    return %c0_i32, %c0_i32_0 : i32, i32
  }
  func.func @transform_4(%arg0: i32) -> (i32, i32) {
    %c0_i32 = arith.constant 0 : i32
    %c0_i32_0 = arith.constant 0 : i32
    %c0_i32_1 = arith.constant 0 : i32
    return %c0_i32, %c0_i32_0 : i32, i32
  }
  func.func @transform_5(%arg0: i32) -> (i32, i32) {
    %c0_i32 = arith.constant 0 : i32
    %c0_i32_0 = arith.constant 0 : i32
    %c0_i32_1 = arith.constant 0 : i32
    return %c0_i32, %c0_i32_0 : i32, i32
  }
  func.func @transform_6(%arg0: i32) -> (i32, i32) {
    %c0_i32 = arith.constant 0 : i32
    %c0_i32_0 = arith.constant 0 : i32
    %c0_i32_1 = arith.constant 0 : i32
    return %c0_i32, %c0_i32_0 : i32, i32
  }
  func.func @transform_7(%arg0: i32) -> i32 {
    %c0_i32 = arith.constant 0 : i32
    %c0_i32_0 = arith.constant 0 : i32
    return %c0_i32 : i32
  }
  func.func @transform_8(%arg0: i32) -> (i32, i32, i32) {
    %c0_i32 = arith.constant 0 : i32
    %c0_i32_0 = arith.constant 0 : i32
    %c0_i32_1 = arith.constant 0 : i32
    return %arg0, %c0_i32, %c0_i32_0 : i32, i32, i32
  }
}

</mosaic_0001>

<llo_original>
// kernel: tpu_custom_call.1
$region0: #{tpu_custom_call.1}
  #allocation0 [shape = 'u32[]', space=smem, size = 0x4, offset = 0x4, fixed_abs, tag = 'smem constant byte address 0x4 - core index']
  #allocation1 [shape = 'u32[72,128]{1,0:T(1,128)}', space=vmem, size = 0x9000, scoped, tag = 'internal scratch']
  #allocation2 [shape = 'f32[1]{0:T(128)S(6)}', space=smem, size = 0x200, scoped, tag = 'scoped memory for tpu_custom_call.1']
  %s0 = inlined_call_operand.vmem [shape: f32[16,8,16], index: 0, kind: input, shape index: {}]
  %s1 = inlined_call_operand.vmem [shape: f32[16,8,8], index: 1, kind: input, shape index: {}]
  %s2 = inlined_call_operand.vmem [shape: f32[16,128], index: 2, kind: input, shape index: {}]
  %s3 = inlined_call_operand.vmem [shape: f32[1,128], index: 3, kind: input, shape index: {}]
  %s4 = inlined_call_operand.hbm [shape: f32[128,128], index: 4, kind: input, shape index: {}]
  %s5 = inlined_call_operand.vmem [shape: f32[1,128], index: 5, kind: input, shape index: {}]
  %s6 = inlined_call_operand.vmem [shape: f32[1,128], index: 6, kind: input, shape index: {}]
  %s7 = inlined_call_operand.<no memory space> [shape: f32[1], index: 7, kind: input, shape index: {}]
  %s8 = inlined_call_operand.hbm [shape: f32[1,1,16], index: 8, kind: output, shape index: {}]
  %s9 = sld [smem:[#allocation0]]
  $region46: #{tpu_custom_call.1} parent=0
    _
  %s11 = ssub.s32 1, %s9
  %s12 = scalar_select 0, %s11, %s9
  %13 = sst [smem:[#allocation2]] %s7
  $region1: #{tpu_custom_call.1} parent=0
    #allocation3 [shape = 'u8[65536]{0}', space=vmem, size = 0x10000, scoped, tag = 'input window, operand 4, single buffered']
    #allocation4 [shape = 's32[1]{0}', space=sflag, size = 0x4, scoped, tag = 'scoped memory for tpu_custom_call.1']
    #allocation5 [shape = 's32[1]{0}', space=sflag, size = 0x4, scoped, tag = 'scoped memory for tpu_custom_call.1']
    #allocation6 [shape = 'u8[512]{0}', space=vmem, size = 0x400, scoped, tag = 'output window, operand 0, single buffered']
    %14 = vsyncpa [#allocation4], 0
    %15 = vsyncpa [#allocation5], 0
    // Predicated region
    $region2: #{tpu_custom_call.1} parent=1 // pred_check
      _
    $region3: #{tpu_custom_call.1} parent=1 // pred_check_branch
      %17 = sbr.rel (0) target = $region5
    $region4: #{tpu_custom_call.1} parent=1 // pred_region
      _
    $region5: #{tpu_custom_call.1} parent=1 // pred_fallthru
      _
    // Predicated region
    $region6: #{tpu_custom_call.1} parent=1 // pred_check
      _
    $region7: #{tpu_custom_call.1} parent=1 // pred_check_branch
      %19 = sbr.rel (0) target = $region9
    $region8: #{tpu_custom_call.1} parent=1 // pred_region
      _
    $region9: #{tpu_custom_call.1} parent=1 // pred_fallthru
      _
    // Predicated region
    $region10: #{tpu_custom_call.1} parent=1 // pred_check
      _
    $region11: #{tpu_custom_call.1} parent=1 // pred_check_branch
      %21 = sbr.rel (0) target = $region13
    $region12: #{tpu_custom_call.1} parent=1 // pred_region
      _
    $region13: #{tpu_custom_call.1} parent=1 // pred_fallthru
      _
    // Predicated region
    $region14: #{tpu_custom_call.1} parent=1 // pred_check
      _
    $region15: #{tpu_custom_call.1} parent=1 // pred_check_branch
      %23 = sbr.rel (0) target = $region17
    $region16: #{tpu_custom_call.1} parent=1 // pred_region
      _
    $region17: #{tpu_custom_call.1} parent=1 // pred_fallthru
      _
    // Predicated region
    $region18: #{tpu_custom_call.1} parent=1 // pred_check
      _
    $region19: #{tpu_custom_call.1} parent=1 // pred_check_branch
      %25 = sbr.rel (0) target = $region21
    $region20: #{tpu_custom_call.1} parent=1 // pred_region
      %27 = vsyncadd [#allocation4], 0
      %s28 = sshll.u32 %s4, 4
      %s29 = int_to_ptr.hbm [resolvable:$true] %s28
      %s30 = sshll.u32 [#allocation3], 4
      %s31 = int_to_ptr.vmem [resolvable:$true] %s30
      %36 = dma.hbm_to_vmem [thread:$0]  %s29, 2048, %s31, [#allocation4], 128, 128, 8
    $region21: #{tpu_custom_call.1} parent=1 // pred_fallthru
      _
    // Predicated region
    $region22: #{tpu_custom_call.1} parent=1 // pred_check
      _
    $region23: #{tpu_custom_call.1} parent=1 // pred_check_branch
      %38 = sbr.rel (0) target = $region25
    $region24: #{tpu_custom_call.1} parent=1 // pred_region
      _
    $region25: #{tpu_custom_call.1} parent=1 // pred_fallthru
      _
    // Predicated region
    $region26: #{tpu_custom_call.1} parent=1 // pred_check
      _
    $region27: #{tpu_custom_call.1} parent=1 // pred_check_branch
      %40 = sbr.rel (0) target = $region29
    $region28: #{tpu_custom_call.1} parent=1 // pred_region
      _
    $region29: #{tpu_custom_call.1} parent=1 // pred_fallthru
      _
    // Predicated region
    $region30: #{tpu_custom_call.1} parent=1 // pred_check
      _
    $region31: #{tpu_custom_call.1} parent=1 // pred_check_branch
      %42 = sbr.rel (0) target = $region33
    $region32: #{tpu_custom_call.1} parent=1 // pred_region
      _
    $region33: #{tpu_custom_call.1} parent=1 // pred_fallthru
      _
    // Predicated region
    $region34: #{tpu_custom_call.1} parent=1 // pred_check
      _
    $region35: #{tpu_custom_call.1} parent=1 // pred_check_branch
      %44 = sbr.rel (0) target = $region37
    $region36: #{tpu_custom_call.1} parent=1 // pred_region
      %46 = dma.done [#allocation4], 2048
    $region37: #{tpu_custom_call.1} parent=1 // pred_fallthru
      _
    %v47 = vld [vmem:[%s0] sm:$0xff]
    %v48 = vld [vmem:[%s0 + $0x8] sm:$0xff]
    %v49 = vld [vmem:[%s0 + $0x10] sm:$0xff]
    %v50 = vld [vmem:[%s0 + $0x18] sm:$0xff]
    %v51 = vld [vmem:[%s0 + $0x20] sm:$0xff]
    %v52 = vld [vmem:[%s0 + $0x28] sm:$0xff]
    %v53 = vld [vmem:[%s0 + $0x30] sm:$0xff]
    %v54 = vld [vmem:[%s0 + $0x38] sm:$0xff]
    %v55 = vld [vmem:[%s0 + $0x40] sm:$0xff]
    %v56 = vld [vmem:[%s0 + $0x48] sm:$0xff]
    %v57 = vld [vmem:[%s0 + $0x50] sm:$0xff]
    %v58 = vld [vmem:[%s0 + $0x58] sm:$0xff]
    %v59 = vld [vmem:[%s0 + $0x60] sm:$0xff]
    %v60 = vld [vmem:[%s0 + $0x68] sm:$0xff]
    %v61 = vld [vmem:[%s0 + $0x70] sm:$0xff]
    %v62 = vld [vmem:[%s0 + $0x78] sm:$0xff]
    %v63 = vld [vmem:[%s2] sm:$0xff]
    %v64 = vld [vmem:[%s2 + $0x8] sm:$0xff]
    %v65 = vld [vmem:[%s3] sm:$0x1]
    %v67 = vperm.slane %v65, 0
    %vm69 = vcmask 130048
    %v71 = vsel %vm69, %v47, 0
    %v74 = vsel %vm69, %v48, 0
    %v77 = vsel %vm69, %v49, 0
    %v80 = vsel %vm69, %v50, 0
    %v83 = vsel %vm69, %v51, 0
    %v86 = vsel %vm69, %v52, 0
    %v89 = vsel %vm69, %v53, 0
    %v92 = vsel %vm69, %v54, 0
    %v95 = vsel %vm69, %v55, 0
    %v98 = vsel %vm69, %v56, 0
    %v101 = vsel %vm69, %v57, 0
    %v104 = vsel %vm69, %v58, 0
    %v107 = vsel %vm69, %v59, 0
    %v110 = vsel %vm69, %v60, 0
    %v113 = vsel %vm69, %v61, 0
    %v116 = vsel %vm69, %v62, 0
    %118 = vmatpush.msra.mxu0 0.0
    %119 = vmatpush.msra.mxu0 0.0
    %120 = vmatpush.msra.mxu0 0.0
    %121 = vmatpush.msra.mxu0 0.0
    %122 = vmatpush.msra.mxu0 0.0
    %123 = vmatpush.msra.mxu0 0.0
    %124 = vmatpush.msra.mxu0 0.0
    %125 = vmatpush.msra.mxu0 0.0
    %126 = vmatpush.msra.mxu0 0.0
    %127 = vmatpush.msra.mxu0 0.0
    %128 = vmatpush.msra.mxu0 0.0
    %129 = vmatpush.msra.mxu0 0.0
    %130 = vmatpush.msra.mxu0 0.0
    %131 = vmatpush.msra.mxu0 0.0
    %132 = vmatpush.msra.mxu0 %v64
    %133 = vmatpush.msra.mxu0 %v63
    %134 = vmatmul.f32.gmra.mxu0 %v71
    %v135 = vpop.f32.mrf.mxu0
    %v136 = vadd.f32 %v67, %v135
    %137 = vmatmul.f32.gmra.mxu0 %v74
    %v138 = vpop.f32.mrf.mxu0
    %v139 = vadd.f32 %v67, %v138
    %140 = vmatmul.f32.gmra.mxu0 %v77
    %v141 = vpop.f32.mrf.mxu0
    %v142 = vadd.f32 %v67, %v141
    %143 = vmatmul.f32.gmra.mxu0 %v80
    %v144 = vpop.f32.mrf.mxu0
    %v145 = vadd.f32 %v67, %v144
    %146 = vmatmul.f32.gmra.mxu0 %v83
    %v147 = vpop.f32.mrf.mxu0
    %v148 = vadd.f32 %v67, %v147
    %149 = vmatmul.f32.gmra.mxu0 %v86
    %v150 = vpop.f32.mrf.mxu0
    %v151 = vadd.f32 %v67, %v150
    %152 = vmatmul.f32.gmra.mxu0 %v89
    %v153 = vpop.f32.mrf.mxu0
    %v154 = vadd.f32 %v67, %v153
    %155 = vmatmul.f32.gmra.mxu0 %v92
    %v156 = vpop.f32.mrf.mxu0
    %v157 = vadd.f32 %v67, %v156
    %158 = vmatmul.f32.gmra.mxu0 %v95
    %v159 = vpop.f32.mrf.mxu0
    %v160 = vadd.f32 %v67, %v159
    %161 = vmatmul.f32.gmra.mxu0 %v98
    %v162 = vpop.f32.mrf.mxu0
    %v163 = vadd.f32 %v67, %v162
    %164 = vmatmul.f32.gmra.mxu0 %v101
    %v165 = vpop.f32.mrf.mxu0
    %v166 = vadd.f32 %v67, %v165
    %167 = vmatmul.f32.gmra.mxu0 %v104
    %v168 = vpop.f32.mrf.mxu0
    %v169 = vadd.f32 %v67, %v168
    %170 = vmatmul.f32.gmra.mxu0 %v107
    %v171 = vpop.f32.mrf.mxu0
    %v172 = vadd.f32 %v67, %v171
    %173 = vmatmul.f32.gmra.mxu0 %v110
    %v174 = vpop.f32.mrf.mxu0
    %v175 = vadd.f32 %v67, %v174
    %176 = vmatmul.f32.gmra.mxu0 %v113
    %v177 = vpop.f32.mrf.mxu0
    %v178 = vadd.f32 %v67, %v177
    %179 = vmatmul.f32.gmra.mxu0 %v116
    %v180 = vpop.f32.mrf.mxu0
    %v181 = vadd.f32 %v67, %v180
    %182 = vdwg.mxu0
    %v183 = vld [vmem:[%s1] sm:$0xff]
    %v184 = vld [vmem:[%s1 + $0x8] sm:$0xff]
    %v185 = vld [vmem:[%s1 + $0x10] sm:$0xff]
    %v186 = vld [vmem:[%s1 + $0x18] sm:$0xff]
    %v187 = vld [vmem:[%s1 + $0x20] sm:$0xff]
    %v188 = vld [vmem:[%s1 + $0x28] sm:$0xff]
    %v189 = vld [vmem:[%s1 + $0x30] sm:$0xff]
    %v190 = vld [vmem:[%s1 + $0x38] sm:$0xff]
    %v191 = vld [vmem:[%s1 + $0x40] sm:$0xff]
    %v192 = vld [vmem:[%s1 + $0x48] sm:$0xff]
    %v193 = vld [vmem:[%s1 + $0x50] sm:$0xff]
    %v194 = vld [vmem:[%s1 + $0x58] sm:$0xff]
    %v195 = vld [vmem:[%s1 + $0x60] sm:$0xff]
    %v196 = vld [vmem:[%s1 + $0x68] sm:$0xff]
    %v197 = vld [vmem:[%s1 + $0x70] sm:$0xff]
    %v198 = vld [vmem:[%s1 + $0x78] sm:$0xff]
    %vm199 = vcmask 64512
    %v201 = vsel %vm199, %v183, 0
    %203 = vmatpush.msra.mxu0 0.0
    %204 = vmatpush.msra.mxu0 0.0
    %205 = vmatpush.msra.mxu0 0.0
    %206 = vmatpush.msra.mxu0 0.0
    %207 = vmatpush.msra.mxu0 0.0
    %208 = vmatpush.msra.mxu0 0.0
    %209 = vmatpush.msra.mxu0 0.0
    %210 = vmatpush.msra.mxu0 0.0
    %211 = vmatpush.msra.mxu0 0.0
    %212 = vmatpush.msra.mxu0 0.0
    %213 = vmatpush.msra.mxu0 0.0
    %214 = vmatpush.msra.mxu0 0.0
    %215 = vmatpush.msra.mxu0 0.0
    %216 = vmatpush.msra.mxu0 0.0
    %217 = vmatpush.msra.mxu0 0.0
    %218 = vmatpush.msra.mxu0 %v136
    %219 = vmatmul.f32.gmra.mxu0 %v201
    %v220 = vpop.f32.mrf.mxu0
    %v221 = vadd.f32 0.0, %v220
    %222 = vdwg.mxu0
    %v224 = vsel %vm199, %v184, 0
    %226 = vmatpush.msra.mxu0 0.0
    %227 = vmatpush.msra.mxu0 0.0
    %228 = vmatpush.msra.mxu0 0.0
    %229 = vmatpush.msra.mxu0 0.0
    %230 = vmatpush.msra.mxu0 0.0
    %231 = vmatpush.msra.mxu0 0.0
    %232 = vmatpush.msra.mxu0 0.0
    %233 = vmatpush.msra.mxu0 0.0
    %234 = vmatpush.msra.mxu0 0.0
    %235 = vmatpush.msra.mxu0 0.0
    %236 = vmatpush.msra.mxu0 0.0
    %237 = vmatpush.msra.mxu0 0.0
    %238 = vmatpush.msra.mxu0 0.0
    %239 = vmatpush.msra.mxu0 0.0
    %240 = vmatpush.msra.mxu0 0.0
    %241 = vmatpush.msra.mxu0 %v139
    %242 = vmatmul.f32.gmra.mxu0 %v224
    %v243 = vpop.f32.mrf.mxu0
    %v244 = vadd.f32 0.0, %v243
    %245 = vdwg.mxu0
    %v247 = vsel %vm199, %v185, 0
    %249 = vmatpush.msra.mxu0 0.0
    %250 = vmatpush.msra.mxu0 0.0
    %251 = vmatpush.msra.mxu0 0.0
    %252 = vmatpush.msra.mxu0 0.0
    %253 = vmatpush.msra.mxu0 0.0
    %254 = vmatpush.msra.mxu0 0.0
    %255 = vmatpush.msra.mxu0 0.0
    %256 = vmatpush.msra.mxu0 0.0
    %257 = vmatpush.msra.mxu0 0.0
    %258 = vmatpush.msra.mxu0 0.0
    %259 = vmatpush.msra.mxu0 0.0
    %260 = vmatpush.msra.mxu0 0.0
    %261 = vmatpush.msra.mxu0 0.0
    %262 = vmatpush.msra.mxu0 0.0
    %263 = vmatpush.msra.mxu0 0.0
    %264 = vmatpush.msra.mxu0 %v142
    %265 = vmatmul.f32.gmra.mxu0 %v247
    %v266 = vpop.f32.mrf.mxu0
    %v267 = vadd.f32 0.0, %v266
    %268 = vdwg.mxu0
    %v270 = vsel %vm199, %v186, 0
    %272 = vmatpush.msra.mxu0 0.0
    %273 = vmatpush.msra.mxu0 0.0
    %274 = vmatpush.msra.mxu0 0.0
    %275 = vmatpush.msra.mxu0 0.0
    %276 = vmatpush.msra.mxu0 0.0
    %277 = vmatpush.msra.mxu0 0.0
    %278 = vmatpush.msra.mxu0 0.0
    %279 = vmatpush.msra.mxu0 0.0
    %280 = vmatpush.msra.mxu0 0.0
    %281 = vmatpush.msra.mxu0 0.0
    %282 = vmatpush.msra.mxu0 0.0
    %283 = vmatpush.msra.mxu0 0.0
    %284 = vmatpush.msra.mxu0 0.0
    %285 = vmatpush.msra.mxu0 0.0
    %286 = vmatpush.msra.mxu0 0.0
    %287 = vmatpush.msra.mxu0 %v145
    %288 = vmatmul.f32.gmra.mxu0 %v270
    %v289 = vpop.f32.mrf.mxu0
    %v290 = vadd.f32 0.0, %v289
    %291 = vdwg.mxu0
    %v293 = vsel %vm199, %v187, 0
    %295 = vmatpush.msra.mxu0 0.0
    %296 = vmatpush.msra.mxu0 0.0
    %297 = vmatpush.msra.mxu0 0.0
    %298 = vmatpush.msra.mxu0 0.0
    %299 = vmatpush.msra.mxu0 0.0
    %300 = vmatpush.msra.mxu0 0.0
    %301 = vmatpush.msra.mxu0 0.0
    %302 = vmatpush.msra.mxu0 0.0
    %303 = vmatpush.msra.mxu0 0.0
    %304 = vmatpush.msra.mxu0 0.0
    %305 = vmatpush.msra.mxu0 0.0
    %306 = vmatpush.msra.mxu0 0.0
    %307 = vmatpush.msra.mxu0 0.0
    %308 = vmatpush.msra.mxu0 0.0
    %309 = vmatpush.msra.mxu0 0.0
    %310 = vmatpush.msra.mxu0 %v148
    %311 = vmatmul.f32.gmra.mxu0 %v293
    %v312 = vpop.f32.mrf.mxu0
    %v313 = vadd.f32 0.0, %v312
    %314 = vdwg.mxu0
    %v316 = vsel %vm199, %v188, 0
    %318 = vmatpush.msra.mxu0 0.0
    %319 = vmatpush.msra.mxu0 0.0
    %320 = vmatpush.msra.mxu0 0.0
    %321 = vmatpush.msra.mxu0 0.0
    %322 = vmatpush.msra.mxu0 0.0
    %323 = vmatpush.msra.mxu0 0.0
    %324 = vmatpush.msra.mxu0 0.0
    %325 = vmatpush.msra.mxu0 0.0
    %326 = vmatpush.msra.mxu0 0.0
    %327 = vmatpush.msra.mxu0 0.0
    %328 = vmatpush.msra.mxu0 0.0
    %329 = vmatpush.msra.mxu0 0.0
    %330 = vmatpush.msra.mxu0 0.0
    %331 = vmatpush.msra.mxu0 0.0
    %332 = vmatpush.msra.mxu0 0.0
    %333 = vmatpush.msra.mxu0 %v151
    %334 = vmatmul.f32.gmra.mxu0 %v316
    %v335 = vpop.f32.mrf.mxu0
    %v336 = vadd.f32 0.0, %v335
    %337 = vdwg.mxu0
    %v339 = vsel %vm199, %v189, 0
    %341 = vmatpush.msra.mxu0 0.0
    %342 = vmatpush.msra.mxu0 0.0
    %343 = vmatpush.msra.mxu0 0.0
    %344 = vmatpush.msra.mxu0 0.0
    %345 = vmatpush.msra.mxu0 0.0
    %346 = vmatpush.msra.mxu0 0.0
    %347 = vmatpush.msra.mxu0 0.0
    %348 = vmatpush.msra.mxu0 0.0
    %349 = vmatpush.msra.mxu0 0.0
    %350 = vmatpush.msra.mxu0 0.0
    %351 = vmatpush.msra.mxu0 0.0
    %352 = vmatpush.msra.mxu0 0.0
    %353 = vmatpush.msra.mxu0 0.0
    %354 = vmatpush.msra.mxu0 0.0
    %355 = vmatpush.msra.mxu0 0.0
    %356 = vmatpush.msra.mxu0 %v154
    %357 = vmatmul.f32.gmra.mxu0 %v339
    %v358 = vpop.f32.mrf.mxu0
    %v359 = vadd.f32 0.0, %v358
    %360 = vdwg.mxu0
    %v362 = vsel %vm199, %v190, 0
    %364 = vmatpush.msra.mxu0 0.0
    %365 = vmatpush.msra.mxu0 0.0
    %366 = vmatpush.msra.mxu0 0.0
    %367 = vmatpush.msra.mxu0 0.0
    %368 = vmatpush.msra.mxu0 0.0
    %369 = vmatpush.msra.mxu0 0.0
    %370 = vmatpush.msra.mxu0 0.0
    %371 = vmatpush.msra.mxu0 0.0
    %372 = vmatpush.msra.mxu0 0.0
    %373 = vmatpush.msra.mxu0 0.0
    %374 = vmatpush.msra.mxu0 0.0
    %375 = vmatpush.msra.mxu0 0.0
    %376 = vmatpush.msra.mxu0 0.0
    %377 = vmatpush.msra.mxu0 0.0
    %378 = vmatpush.msra.mxu0 0.0
    %379 = vmatpush.msra.mxu0 %v157
    %380 = vmatmul.f32.gmra.mxu0 %v362
    %v381 = vpop.f32.mrf.mxu0
    %v382 = vadd.f32 0.0, %v381
    %383 = vdwg.mxu0
    %v385 = vsel %vm199, %v191, 0
    %387 = vmatpush.msra.mxu0 0.0
    %388 = vmatpush.msra.mxu0 0.0
    %389 = vmatpush.msra.mxu0 0.0
    %390 = vmatpush.msra.mxu0 0.0
    %391 = vmatpush.msra.mxu0 0.0
    %392 = vmatpush.msra.mxu0 0.0
    %393 = vmatpush.msra.mxu0 0.0
    %394 = vmatpush.msra.mxu0 0.0
    %395 = vmatpush.msra.mxu0 0.0
    %396 = vmatpush.msra.mxu0 0.0
    %397 = vmatpush.msra.mxu0 0.0
    %398 = vmatpush.msra.mxu0 0.0
    %399 = vmatpush.msra.mxu0 0.0
    %400 = vmatpush.msra.mxu0 0.0
    %401 = vmatpush.msra.mxu0 0.0
    %402 = vmatpush.msra.mxu0 %v160
    %403 = vmatmul.f32.gmra.mxu0 %v385
    %v404 = vpop.f32.mrf.mxu0
    %v405 = vadd.f32 0.0, %v404
    %406 = vdwg.mxu0
    %v408 = vsel %vm199, %v192, 0
    %410 = vmatpush.msra.mxu0 0.0
    %411 = vmatpush.msra.mxu0 0.0
    %412 = vmatpush.msra.mxu0 0.0
    %413 = vmatpush.msra.mxu0 0.0
    %414 = vmatpush.msra.mxu0 0.0
    %415 = vmatpush.msra.mxu0 0.0
    %416 = vmatpush.msra.mxu0 0.0
    %417 = vmatpush.msra.mxu0 0.0
    %418 = vmatpush.msra.mxu0 0.0
    %419 = vmatpush.msra.mxu0 0.0
    %420 = vmatpush.msra.mxu0 0.0
    %421 = vmatpush.msra.mxu0 0.0
    %422 = vmatpush.msra.mxu0 0.0
    %423 = vmatpush.msra.mxu0 0.0
    %424 = vmatpush.msra.mxu0 0.0
    %425 = vmatpush.msra.mxu0 %v163
    %426 = vmatmul.f32.gmra.mxu0 %v408
    %v427 = vpop.f32.mrf.mxu0
    %v428 = vadd.f32 0.0, %v427
    %429 = vdwg.mxu0
    %v431 = vsel %vm199, %v193, 0
    %433 = vmatpush.msra.mxu0 0.0
    %434 = vmatpush.msra.mxu0 0.0
    %435 = vmatpush.msra.mxu0 0.0
    %436 = vmatpush.msra.mxu0 0.0
    %437 = vmatpush.msra.mxu0 0.0
    %438 = vmatpush.msra.mxu0 0.0
    %439 = vmatpush.msra.mxu0 0.0
    %440 = vmatpush.msra.mxu0 0.0
    %441 = vmatpush.msra.mxu0 0.0
    %442 = vmatpush.msra.mxu0 0.0
    %443 = vmatpush.msra.mxu0 0.0
    %444 = vmatpush.msra.mxu0 0.0
    %445 = vmatpush.msra.mxu0 0.0
    %446 = vmatpush.msra.mxu0 0.0
    %447 = vmatpush.msra.mxu0 0.0
    %448 = vmatpush.msra.mxu0 %v166
    %449 = vmatmul.f32.gmra.mxu0 %v431
    %v450 = vpop.f32.mrf.mxu0
    %v451 = vadd.f32 0.0, %v450
    %452 = vdwg.mxu0
    %v454 = vsel %vm199, %v194, 0
    %456 = vmatpush.msra.mxu0 0.0
    %457 = vmatpush.msra.mxu0 0.0
    %458 = vmatpush.msra.mxu0 0.0
    %459 = vmatpush.msra.mxu0 0.0
    %460 = vmatpush.msra.mxu0 0.0
    %461 = vmatpush.msra.mxu0 0.0
    %462 = vmatpush.msra.mxu0 0.0
    %463 = vmatpush.msra.mxu0 0.0
    %464 = vmatpush.msra.mxu0 0.0
    %465 = vmatpush.msra.mxu0 0.0
    %466 = vmatpush.msra.mxu0 0.0
    %467 = vmatpush.msra.mxu0 0.0
    %468 = vmatpush.msra.mxu0 0.0
    %469 = vmatpush.msra.mxu0 0.0
    %470 = vmatpush.msra.mxu0 0.0
    %471 = vmatpush.msra.mxu0 %v169
    %472 = vmatmul.f32.gmra.mxu0 %v454
    %v473 = vpop.f32.mrf.mxu0
    %v474 = vadd.f32 0.0, %v473
    %475 = vdwg.mxu0
    %v477 = vsel %vm199, %v195, 0
    %479 = vmatpush.msra.mxu0 0.0
    %480 = vmatpush.msra.mxu0 0.0
    %481 = vmatpush.msra.mxu0 0.0
    %482 = vmatpush.msra.mxu0 0.0
    %483 = vmatpush.msra.mxu0 0.0
    %484 = vmatpush.msra.mxu0 0.0
    %485 = vmatpush.msra.mxu0 0.0
    %486 = vmatpush.msra.mxu0 0.0
    %487 = vmatpush.msra.mxu0 0.0
    %488 = vmatpush.msra.mxu0 0.0
    %489 = vmatpush.msra.mxu0 0.0
    %490 = vmatpush.msra.mxu0 0.0
    %491 = vmatpush.msra.mxu0 0.0
    %492 = vmatpush.msra.mxu0 0.0
    %493 = vmatpush.msra.mxu0 0.0
    %494 = vmatpush.msra.mxu0 %v172
    %495 = vmatmul.f32.gmra.mxu0 %v477
    %v496 = vpop.f32.mrf.mxu0
    %v497 = vadd.f32 0.0, %v496
    %498 = vdwg.mxu0
    %v500 = vsel %vm199, %v196, 0
    %502 = vmatpush.msra.mxu0 0.0
    %503 = vmatpush.msra.mxu0 0.0
    %504 = vmatpush.msra.mxu0 0.0
    %505 = vmatpush.msra.mxu0 0.0
    %506 = vmatpush.msra.mxu0 0.0
    %507 = vmatpush.msra.mxu0 0.0
    %508 = vmatpush.msra.mxu0 0.0
    %509 = vmatpush.msra.mxu0 0.0
    %510 = vmatpush.msra.mxu0 0.0
    %511 = vmatpush.msra.mxu0 0.0
    %512 = vmatpush.msra.mxu0 0.0
    %513 = vmatpush.msra.mxu0 0.0
    %514 = vmatpush.msra.mxu0 0.0
    %515 = vmatpush.msra.mxu0 0.0
    %516 = vmatpush.msra.mxu0 0.0
    %517 = vmatpush.msra.mxu0 %v175
    %518 = vmatmul.f32.gmra.mxu0 %v500
    %v519 = vpop.f32.mrf.mxu0
    %v520 = vadd.f32 0.0, %v519
    %521 = vdwg.mxu0
    %v523 = vsel %vm199, %v197, 0
    %525 = vmatpush.msra.mxu0 0.0
    %526 = vmatpush.msra.mxu0 0.0
    %527 = vmatpush.msra.mxu0 0.0
    %528 = vmatpush.msra.mxu0 0.0
    %529 = vmatpush.msra.mxu0 0.0
    %530 = vmatpush.msra.mxu0 0.0
    %531 = vmatpush.msra.mxu0 0.0
    %532 = vmatpush.msra.mxu0 0.0
    %533 = vmatpush.msra.mxu0 0.0
    %534 = vmatpush.msra.mxu0 0.0
    %535 = vmatpush.msra.mxu0 0.0
    %536 = vmatpush.msra.mxu0 0.0
    %537 = vmatpush.msra.mxu0 0.0
    %538 = vmatpush.msra.mxu0 0.0
    %539 = vmatpush.msra.mxu0 0.0
    %540 = vmatpush.msra.mxu0 %v178
    %541 = vmatmul.f32.gmra.mxu0 %v523
    %v542 = vpop.f32.mrf.mxu0
    %v543 = vadd.f32 0.0, %v542
    %544 = vdwg.mxu0
    %v546 = vsel %vm199, %v198, 0
    %548 = vmatpush.msra.mxu0 0.0
    %549 = vmatpush.msra.mxu0 0.0
    %550 = vmatpush.msra.mxu0 0.0
    %551 = vmatpush.msra.mxu0 0.0
    %552 = vmatpush.msra.mxu0 0.0
    %553 = vmatpush.msra.mxu0 0.0
    %554 = vmatpush.msra.mxu0 0.0
    %555 = vmatpush.msra.mxu0 0.0
    %556 = vmatpush.msra.mxu0 0.0
    %557 = vmatpush.msra.mxu0 0.0
    %558 = vmatpush.msra.mxu0 0.0
    %559 = vmatpush.msra.mxu0 0.0
    %560 = vmatpush.msra.mxu0 0.0
    %561 = vmatpush.msra.mxu0 0.0
    %562 = vmatpush.msra.mxu0 0.0
    %563 = vmatpush.msra.mxu0 %v181
    %564 = vmatmul.f32.gmra.mxu0 %v546
    %v565 = vpop.f32.mrf.mxu0
    %v566 = vadd.f32 0.0, %v565
    %567 = vdwg.mxu0
    %v568 = vld [vmem:[#allocation3] sm:$0xff]
    %v569 = vld [vmem:[#allocation3 + $0x8] sm:$0xff]
    %v570 = vld [vmem:[#allocation3 + $0x10] sm:$0xff]
    %v571 = vld [vmem:[#allocation3 + $0x18] sm:$0xff]
    %v572 = vld [vmem:[#allocation3 + $0x20] sm:$0xff]
    %v573 = vld [vmem:[#allocation3 + $0x28] sm:$0xff]
    %v574 = vld [vmem:[#allocation3 + $0x30] sm:$0xff]
    %v575 = vld [vmem:[#allocation3 + $0x38] sm:$0xff]
    %v576 = vld [vmem:[#allocation3 + $0x40] sm:$0xff]
    %v577 = vld [vmem:[#allocation3 + $0x48] sm:$0xff]
    %v578 = vld [vmem:[#allocation3 + $0x50] sm:$0xff]
    %v579 = vld [vmem:[#allocation3 + $0x58] sm:$0xff]
    %v580 = vld [vmem:[#allocation3 + $0x60] sm:$0xff]
    %v581 = vld [vmem:[#allocation3 + $0x68] sm:$0xff]
    %v582 = vld [vmem:[#allocation3 + $0x70] sm:$0xff]
    %v583 = vld [vmem:[#allocation3 + $0x78] sm:$0xff]
    %v584 = vld [vmem:[%s5] sm:$0x1]
    %v586 = vperm.slane %v584, 0
    %588 = vmatpush.msra.mxu0 %v583
    %589 = vmatpush.msra.mxu0 %v582
    %590 = vmatpush.msra.mxu0 %v581
    %591 = vmatpush.msra.mxu0 %v580
    %592 = vmatpush.msra.mxu0 %v579
    %593 = vmatpush.msra.mxu0 %v578
    %594 = vmatpush.msra.mxu0 %v577
    %595 = vmatpush.msra.mxu0 %v576
    %596 = vmatpush.msra.mxu0 %v575
    %597 = vmatpush.msra.mxu0 %v574
    %598 = vmatpush.msra.mxu0 %v573
    %599 = vmatpush.msra.mxu0 %v572
    %600 = vmatpush.msra.mxu0 %v571
    %601 = vmatpush.msra.mxu0 %v570
    %602 = vmatpush.msra.mxu0 %v569
    %603 = vmatpush.msra.mxu0 %v568
    %604 = vmatmul.f32.gmra.mxu0 %v221
    %v605 = vpop.f32.mrf.mxu0
    %v606 = vadd.f32 %v586, %v605
    %607 = vmatmul.f32.gmra.mxu0 %v244
    %v608 = vpop.f32.mrf.mxu0
    %v609 = vadd.f32 %v586, %v608
    %610 = vmatmul.f32.gmra.mxu0 %v267
    %v611 = vpop.f32.mrf.mxu0
    %v612 = vadd.f32 %v586, %v611
    %613 = vmatmul.f32.gmra.mxu0 %v290
    %v614 = vpop.f32.mrf.mxu0
    %v615 = vadd.f32 %v586, %v614
    %616 = vmatmul.f32.gmra.mxu0 %v313
    %v617 = vpop.f32.mrf.mxu0
    %v618 = vadd.f32 %v586, %v617
    %619 = vmatmul.f32.gmra.mxu0 %v336
    %v620 = vpop.f32.mrf.mxu0
    %v621 = vadd.f32 %v586, %v620
    %622 = vmatmul.f32.gmra.mxu0 %v359
    %v623 = vpop.f32.mrf.mxu0
    %v624 = vadd.f32 %v586, %v623
    %625 = vmatmul.f32.gmra.mxu0 %v382
    %v626 = vpop.f32.mrf.mxu0
    %v627 = vadd.f32 %v586, %v626
    %628 = vmatmul.f32.gmra.mxu0 %v405
    %v629 = vpop.f32.mrf.mxu0
    %v630 = vadd.f32 %v586, %v629
    %631 = vmatmul.f32.gmra.mxu0 %v428
    %v632 = vpop.f32.mrf.mxu0
    %v633 = vadd.f32 %v586, %v632
    %634 = vmatmul.f32.gmra.mxu0 %v451
    %v635 = vpop.f32.mrf.mxu0
    %v636 = vadd.f32 %v586, %v635
    %637 = vmatmul.f32.gmra.mxu0 %v474
    %v638 = vpop.f32.mrf.mxu0
    %v639 = vadd.f32 %v586, %v638
    %640 = vmatmul.f32.gmra.mxu0 %v497
    %v641 = vpop.f32.mrf.mxu0
    %v642 = vadd.f32 %v586, %v641
    %643 = vmatmul.f32.gmra.mxu0 %v520
    %v644 = vpop.f32.mrf.mxu0
    %v645 = vadd.f32 %v586, %v644
    %646 = vmatmul.f32.gmra.mxu0 %v543
    %v647 = vpop.f32.mrf.mxu0
    %v648 = vadd.f32 %v586, %v647
    %649 = vmatmul.f32.gmra.mxu0 %v566
    %v650 = vpop.f32.mrf.mxu0
    %v651 = vadd.f32 %v586, %v650
    %652 = vdwg.mxu0
    %v653 = vmax.f32 %v606, 0.0
    %v654 = vmax.f32 %v609, 0.0
    %v655 = vmax.f32 %v612, 0.0
    %v656 = vmax.f32 %v615, 0.0
    %v657 = vmax.f32 %v618, 0.0
    %v658 = vmax.f32 %v621, 0.0
    %v659 = vmax.f32 %v624, 0.0
    %v660 = vmax.f32 %v627, 0.0
    %v661 = vmax.f32 %v630, 0.0
    %v662 = vmax.f32 %v633, 0.0
    %v663 = vmax.f32 %v636, 0.0
    %v664 = vmax.f32 %v639, 0.0
    %v665 = vmax.f32 %v642, 0.0
    %v666 = vmax.f32 %v645, 0.0
    %v667 = vmax.f32 %v648, 0.0
    %v668 = vmax.f32 %v651, 0.0
    %v669 = vrot.slane %v653, 4
    %v670 = vadd.f32 %v653, %v669
    %v671 = vrot.slane %v670, 2
    %v672 = vadd.f32 %v670, %v671
    %v673 = vrot.slane %v672, 1
    %v674 = vadd.f32 %v672, %v673
    %v675 = vrot.slane %v654, 4
    %v676 = vadd.f32 %v654, %v675
    %v677 = vrot.slane %v676, 2
    %v678 = vadd.f32 %v676, %v677
    %v679 = vrot.slane %v678, 1
    %v680 = vadd.f32 %v678, %v679
    %v681 = vrot.slane %v655, 4
    %v682 = vadd.f32 %v655, %v681
    %v683 = vrot.slane %v682, 2
    %v684 = vadd.f32 %v682, %v683
    %v685 = vrot.slane %v684, 1
    %v686 = vadd.f32 %v684, %v685
    %v687 = vrot.slane %v656, 4
    %v688 = vadd.f32 %v656, %v687
    %v689 = vrot.slane %v688, 2
    %v690 = vadd.f32 %v688, %v689
    %v691 = vrot.slane %v690, 1
    %v692 = vadd.f32 %v690, %v691
    %v693 = vrot.slane %v657, 4
    %v694 = vadd.f32 %v657, %v693
    %v695 = vrot.slane %v694, 2
    %v696 = vadd.f32 %v694, %v695
    %v697 = vrot.slane %v696, 1
    %v698 = vadd.f32 %v696, %v697
    %v699 = vrot.slane %v658, 4
    %v700 = vadd.f32 %v658, %v699
    %v701 = vrot.slane %v700, 2
    %v702 = vadd.f32 %v700, %v701
    %v703 = vrot.slane %v702, 1
    %v704 = vadd.f32 %v702, %v703
    %v705 = vrot.slane %v659, 4
    %v706 = vadd.f32 %v659, %v705
    %v707 = vrot.slane %v706, 2
    %v708 = vadd.f32 %v706, %v707
    %v709 = vrot.slane %v708, 1
    %v710 = vadd.f32 %v708, %v709
    %v711 = vrot.slane %v660, 4
    %v712 = vadd.f32 %v660, %v711
    %v713 = vrot.slane %v712, 2
    %v714 = vadd.f32 %v712, %v713
    %v715 = vrot.slane %v714, 1
    %v716 = vadd.f32 %v714, %v715
    %v717 = vrot.slane %v661, 4
    %v718 = vadd.f32 %v661, %v717
    %v719 = vrot.slane %v718, 2
    %v720 = vadd.f32 %v718, %v719
    %v721 = vrot.slane %v720, 1
    %v722 = vadd.f32 %v720, %v721
    %v723 = vrot.slane %v662, 4
    %v724 = vadd.f32 %v662, %v723
    %v725 = vrot.slane %v724, 2
    %v726 = vadd.f32 %v724, %v725
    %v727 = vrot.slane %v726, 1
    %v728 = vadd.f32 %v726, %v727
    %v729 = vrot.slane %v663, 4
    %v730 = vadd.f32 %v663, %v729
    %v731 = vrot.slane %v730, 2
    %v732 = vadd.f32 %v730, %v731
    %v733 = vrot.slane %v732, 1
    %v734 = vadd.f32 %v732, %v733
    %v735 = vrot.slane %v664, 4
    %v736 = vadd.f32 %v664, %v735
    %v737 = vrot.slane %v736, 2
    %v738 = vadd.f32 %v736, %v737
    %v739 = vrot.slane %v738, 1
    %v740 = vadd.f32 %v738, %v739
    %v741 = vrot.slane %v665, 4
    %v742 = vadd.f32 %v665, %v741
    %v743 = vrot.slane %v742, 2
    %v744 = vadd.f32 %v742, %v743
    %v745 = vrot.slane %v744, 1
    %v746 = vadd.f32 %v744, %v745
    %v747 = vrot.slane %v666, 4
    %v748 = vadd.f32 %v666, %v747
    %v749 = vrot.slane %v748, 2
    %v750 = vadd.f32 %v748, %v749
    %v751 = vrot.slane %v750, 1
    %v752 = vadd.f32 %v750, %v751
    %v753 = vrot.slane %v667, 4
    %v754 = vadd.f32 %v667, %v753
    %v755 = vrot.slane %v754, 2
    %v756 = vadd.f32 %v754, %v755
    %v757 = vrot.slane %v756, 1
    %v758 = vadd.f32 %v756, %v757
    %v759 = vrot.slane %v668, 4
    %v760 = vadd.f32 %v668, %v759
    %v761 = vrot.slane %v760, 2
    %v762 = vadd.f32 %v760, %v761
    %v763 = vrot.slane %v762, 1
    %v764 = vadd.f32 %v762, %v763
    %v765 = vld [vmem:[%s6] sm:$0x1]
    %v767 = vperm.slane %v765, 0
    %v769 = vmul.f32 %v674, %v767
    %v770 = vmul.f32 %v680, %v767
    %v771 = vmul.f32 %v686, %v767
    %v772 = vmul.f32 %v692, %v767
    %v773 = vmul.f32 %v698, %v767
    %v774 = vmul.f32 %v704, %v767
    %v775 = vmul.f32 %v710, %v767
    %v776 = vmul.f32 %v716, %v767
    %v777 = vmul.f32 %v722, %v767
    %v778 = vmul.f32 %v728, %v767
    %v779 = vmul.f32 %v734, %v767
    %v780 = vmul.f32 %v740, %v767
    %v781 = vmul.f32 %v746, %v767
    %v782 = vmul.f32 %v752, %v767
    %v783 = vmul.f32 %v758, %v767
    %v784 = vmul.f32 %v764, %v767
    %v801 = vrot.slane %v770, 7
    %vm802 = vcmask 1041409
    %v803 = vsel %vm802, %v801, %v769
    %v804 = vrot.slane %v771, 6
    %vm805 = vcmask 1042434
    %v806 = vsel %vm805, %v804, %v803
    %v807 = vrot.slane %v772, 5
    %vm808 = vcmask 1043459
    %v809 = vsel %vm808, %v807, %v806
    %v810 = vrot.slane %v773, 4
    %vm811 = vcmask 1044484
    %v812 = vsel %vm811, %v810, %v809
    %v813 = vrot.slane %v774, 3
    %vm814 = vcmask 1045509
    %v815 = vsel %vm814, %v813, %v812
    %v816 = vrot.slane %v775, 2
    %vm817 = vcmask 1046534
    %v818 = vsel %vm817, %v816, %v815
    %v819 = vrot.slane %v776, 1
    %vm820 = vcmask 1047559
    %v821 = vsel %vm820, %v819, %v818
    %v822 = vrot.slane %v778, 7
    %v823 = vsel %vm802, %v822, %v777
    %v824 = vrot.slane %v779, 6
    %v825 = vsel %vm805, %v824, %v823
    %v826 = vrot.slane %v780, 5
    %v827 = vsel %vm808, %v826, %v825
    %v828 = vrot.slane %v781, 4
    %v829 = vsel %vm811, %v828, %v827
    %v830 = vrot.slane %v782, 3
    %v831 = vsel %vm814, %v830, %v829
    %v832 = vrot.slane %v783, 2
    %v833 = vsel %vm817, %v832, %v831
    %v834 = vrot.slane %v784, 1
    %v835 = vsel %vm820, %v834, %v833
    %838 = vadd.xlane.f32.xlu0 %v821
    %v839 = vpop.xlane.xlu0 %838
    %840 = vadd.xlane.f32.xlu0 %v835
    %v841 = vpop.xlane.xlu0 %840
    %s842 = sld [smem:[#allocation2]]
    %s843 = smul.f32 %s842, 8.0
    %v844 = vstv %s843
    %v845 = vadd.f32 %v839, %v844
    %v846 = vadd.f32 %v841, %v844
    %v849 = vlaneseq
    %v850 = vand.u32 %v849, 127
    %v851 = vperm.slane %v845, %v850
    %v852 = vadd.s32 %v850, 4294967288
    %v853 = vperm.slane %v846, %v852
    %vm854 = vcmask 130112
    %v855 = vsel %vm854, %v853, %v851
    %vm857 = vcmask 122880
    %858 = vst.msk [vmem:[#allocation6] sm:$0x1] %vm857, %v855
    // Predicated region
    $region38: #{tpu_custom_call.1} parent=1 // pred_check
      _
    $region39: #{tpu_custom_call.1} parent=1 // pred_check_branch
      %860 = sbr.rel (0) target = $region41
    $region40: #{tpu_custom_call.1} parent=1 // pred_region
      %862 = vsyncadd [#allocation5], 0
      %s864 = sshll.u32 [#allocation6], 4
      %s865 = int_to_ptr.vmem [resolvable:$true] %s864
      %s866 = sshll.u32 %s8, 4
      %s867 = int_to_ptr.hbm [resolvable:$true] %s866
      %869 = dma.vmem_to_hbm [thread:$0]  %s865, 16, %s867, [#allocation5]
    $region41: #{tpu_custom_call.1} parent=1 // pred_fallthru
      _
    // Predicated region
    $region42: #{tpu_custom_call.1} parent=1 // pred_check
      _
    $region43: #{tpu_custom_call.1} parent=1 // pred_check_branch
      %871 = sbr.rel (0) target = $region45
    $region44: #{tpu_custom_call.1} parent=1 // pred_region
      %873 = dma.done [#allocation5], 16
    $region45: #{tpu_custom_call.1} parent=1 // pred_fallthru
      _
    %874 = vsyncpa [#allocation4], 1
    %875 = vsyncpa [#allocation5], 1

</llo_original>
